<compile_context>
chip_gen: v6e
topology: v6e:2x2x1
jax: 0.10.0
libtpu: 0.0.40
codegen_flags: <defaults>
</compile_context>

<pallas_src>
import functools

import jax
import jax.numpy as jnp
from jax.experimental import pallas as pl
from jax.experimental.pallas import tpu as pltpu

INPUT_SIZE = 10
HIDDEN_SIZE = 20
OUTPUT_SIZE = 2

LANE = 128        # padded lane width for hidden / output / contraction dims
BATCH_PAD = 8     # one full f32 sublane group


def rnn_kernel(x_ref, p_ref, out_ref, *, seq_len, batch_pad):
    # x_ref:   (T*Bp, 128)  time-major x, batch padded to Bp, input padded to
    #                       128 lanes; column INPUT_SIZE is 1.0 (carries bias)
    # p_ref:   (392, 128)   packed params:
    #                         rows [  0:128) W_ih^T (+ bias row at INPUT_SIZE)
    #                         rows [128:256) W_hh^T
    #                         rows [256:384) W_fc^T
    #                         rows [384:392) b_fc in row 384
    # out_ref: (Bp, 128)    fc output, lane-padded (real cols = OUTPUT_SIZE)
    K = p_ref.shape[1]  # 128

    # One hoisted MXU pass: input projection + combined RNN bias for every
    # timestep (bias rides in via the ones column of x).
    xproj = jnp.dot(x_ref[...], p_ref[0:K, :],
                    preferred_element_type=jnp.float32)      # (T*Bp, 128)

    whh = p_ref[K:2 * K, :]                                   # (128, 128)

    # Fully-unrolled recurrence; h lives in vregs.  Padded hidden columns
    # (>= HIDDEN_SIZE) stay exactly zero (zero weights, zero bias, tanh(0)=0).
    h = jnp.zeros((batch_pad, K), jnp.float32)
    for t in range(seq_len):  # seq_len is static & tiny -> full unroll
        h = jnp.tanh(
            jnp.dot(h, whh, preferred_element_type=jnp.float32)
            + xproj[t * batch_pad:(t + 1) * batch_pad, :]     # aligned (8,128)
        )

    # fc(out[:, -1, :]) with lane-padded output columns (sliced outside).
    out_ref[...] = (
        jnp.dot(h, p_ref[2 * K:3 * K, :], preferred_element_type=jnp.float32)
        + p_ref[3 * K:3 * K + 1, :]
    )


def simple_rnn_forward(x, params):
    """x: (B, T, I) float32 -> (B, O) float32."""
    B, T, I = x.shape
    H = params["w_hh"].shape[0]
    O = params["w_fc"].shape[0]
    Bp, K = BATCH_PAD, LANE

    # ---- layout plumbing (cheap one-time XLA ops, outside the kernel) ----
    # time-major, batch padded to a full sublane group, input padded to 128
    # lanes with a ones column at index I that carries the combined RNN bias.
    x_tm = jnp.transpose(x, (1, 0, 2))                          # (T, B, I)
    x_tm = jnp.pad(x_tm, ((0, 0), (0, Bp - B), (0, 0)))         # (T, Bp, I)
    x_aug = jnp.concatenate(
        [x_tm, jnp.ones((T, Bp, 1), jnp.float32)], axis=-1)     # (T, Bp, I+1)
    x_aug = jnp.pad(x_aug, ((0, 0), (0, 0), (0, K - (I + 1))))  # (T, Bp, K)
    x2d = x_aug.reshape(T * Bp, K)

    # Packed parameter slab: one lane-dense (392,128) f32 buffer, one DMA.
    wih_aug = jnp.zeros((K, K), jnp.float32)
    wih_aug = wih_aug.at[:I, :H].set(params["w_ih"].T)
    wih_aug = wih_aug.at[I, :H].set(params["b_ih"] + params["b_hh"])
    whh_pad = jnp.zeros((K, K), jnp.float32).at[:H, :H].set(params["w_hh"].T)
    wfc_pad = jnp.zeros((K, K), jnp.float32).at[:H, :O].set(params["w_fc"].T)
    bfc_pad = jnp.zeros((8, K), jnp.float32).at[0, :O].set(params["b_fc"])
    slab = jnp.concatenate([wih_aug, whh_pad, wfc_pad, bfc_pad], axis=0)

    vmem = pl.BlockSpec(memory_space=pltpu.MemorySpace.VMEM)
    out_pad = pl.pallas_call(
        functools.partial(rnn_kernel, seq_len=T, batch_pad=Bp),
        out_shape=jax.ShapeDtypeStruct((Bp, K), jnp.float32),
        in_specs=[vmem, vmem],
        out_specs=vmem,
    )(x2d, slab)
    # TODO(synk): if B/T scale up, add a leading batch grid axis with
    # dimension_semantics=("parallel", ...) (2 TCs on v7x), switch the unroll
    # to lax.fori_loop with xproj in VMEM scratch, and tile the time axis of
    # x2d against v7x's 64 MiB VMEM instead of whole-sequence residency.
    return out_pad[:B, :O]


def init_params(key, input_size, hidden_size, output_size):
    # Deterministic synthetic init (uniform like PyTorch's default scale),
    # stored in PyTorch (out, in) convention.
    ks = jax.random.split(key, 6)
    s_rnn = 1.0 / jnp.sqrt(hidden_size)
    s_fc = 1.0 / jnp.sqrt(hidden_size)
    return {
        "w_ih": jax.random.uniform(ks[0], (hidden_size, input_size),
                                   jnp.float32, -s_rnn, s_rnn),
        "w_hh": jax.random.uniform(ks[1], (hidden_size, hidden_size),
                                   jnp.float32, -s_rnn, s_rnn),
        "b_ih": jax.random.uniform(ks[2], (hidden_size,),
                                   jnp.float32, -s_rnn, s_rnn),
        "b_hh": jax.random.uniform(ks[3], (hidden_size,),
                                   jnp.float32, -s_rnn, s_rnn),
        "w_fc": jax.random.uniform(ks[4], (output_size, hidden_size),
                                   jnp.float32, -s_fc, s_fc),
        "b_fc": jax.random.uniform(ks[5], (output_size,),
                                   jnp.float32, -s_fc, s_fc),
    }


def reference_forward(x, params):
    """Pure-JAX reference matching PyTorch SimpleRNN.forward semantics."""
    B, T, I = x.shape
    H = params["w_hh"].shape[0]
    h = jnp.zeros((B, H), jnp.float32)
    for t in range(T):
        h = jnp.tanh(x[:, t, :] @ params["w_ih"].T + params["b_ih"]
                     + h @ params["w_hh"].T + params["b_hh"])
    return h @ params["w_fc"].T + params["b_fc"]


if __name__ == "__main__":
    key = jax.random.PRNGKey(0)
    k_x, k_p = jax.random.split(key)

    B, T = 2, 8
    x = jax.random.normal(k_x, (B, T, INPUT_SIZE), jnp.float32)
    params = init_params(k_p, INPUT_SIZE, HIDDEN_SIZE, OUTPUT_SIZE)

    out = simple_rnn_forward(x, params)
    out = jax.block_until_ready(out)

    ref = reference_forward(x, params)
    assert out.shape == (B, OUTPUT_SIZE)
    assert jnp.allclose(out, ref, atol=1e-5, rtol=1e-5)

    print("KERNEL_OK")
</pallas_src>

<mosaic_0001>
module attributes {stable_mosaic.version = 11 : i64} {
  func.func @rnn_kernel(%arg0: memref<64x128xf32, #tpu.memory_space<vmem>>, %arg1: memref<392x128xf32, #tpu.memory_space<vmem>>, %arg2: memref<8x128xf32, #tpu.memory_space<vmem>>) attributes {dimension_semantics = [], scalar_prefetch = 0 : i64, scratch_operands = 0 : i64, tpu.core_type = #tpu.core_type<tc>} {
    %c0 = arith.constant 0 : index
    %c0_0 = arith.constant 0 : index
    %0 = vector.load %arg0[%c0, %c0_0] : memref<64x128xf32, #tpu.memory_space<vmem>>, vector<64x128xf32>
    %c0_1 = arith.constant 0 : index
    %c0_2 = arith.constant 0 : index
    %1 = vector.load %arg1[%c0_1, %c0_2] : memref<392x128xf32, #tpu.memory_space<vmem>>, vector<128x128xf32>
    %cst = arith.constant dense<0.000000e+00> : vector<64x128xf32>
    %2 = tpu.matmul %0, %1, %cst {dimension_numbers = #tpu.dot_dimension_numbers<[1], [0], [0], [1], [0, 0, 1, 1], [], []>} : vector<64x128xf32>, vector<128x128xf32>, vector<64x128xf32> -> vector<64x128xf32>
    %c128 = arith.constant 128 : index
    %c0_3 = arith.constant 0 : index
    %3 = vector.load %arg1[%c128, %c0_3] : memref<392x128xf32, #tpu.memory_space<vmem>>, vector<128x128xf32>
    %cst_4 = arith.constant 0.000000e+00 : f32
    %4 = vector.broadcast %cst_4 : f32 to vector<8x128xf32>
    %cst_5 = arith.constant dense<0.000000e+00> : vector<8x128xf32>
    %5 = tpu.matmul %4, %3, %cst_5 {dimension_numbers = #tpu.dot_dimension_numbers<[1], [0], [0], [1], [0, 0, 1, 1], [], []>} : vector<8x128xf32>, vector<128x128xf32>, vector<8x128xf32> -> vector<8x128xf32>
    %6 = vector.extract_strided_slice %2 {offsets = [0, 0], sizes = [8, 128], strides = [1, 1]} : vector<64x128xf32> to vector<8x128xf32>
    %7 = arith.addf %5, %6 : vector<8x128xf32>
    %8 = math.tanh %7 : vector<8x128xf32>
    %cst_6 = arith.constant dense<0.000000e+00> : vector<8x128xf32>
    %9 = tpu.matmul %8, %3, %cst_6 {dimension_numbers = #tpu.dot_dimension_numbers<[1], [0], [0], [1], [0, 0, 1, 1], [], []>} : vector<8x128xf32>, vector<128x128xf32>, vector<8x128xf32> -> vector<8x128xf32>
    %10 = vector.extract_strided_slice %2 {offsets = [8, 0], sizes = [8, 128], strides = [1, 1]} : vector<64x128xf32> to vector<8x128xf32>
    %11 = arith.addf %9, %10 : vector<8x128xf32>
    %12 = math.tanh %11 : vector<8x128xf32>
    %cst_7 = arith.constant dense<0.000000e+00> : vector<8x128xf32>
    %13 = tpu.matmul %12, %3, %cst_7 {dimension_numbers = #tpu.dot_dimension_numbers<[1], [0], [0], [1], [0, 0, 1, 1], [], []>} : vector<8x128xf32>, vector<128x128xf32>, vector<8x128xf32> -> vector<8x128xf32>
    %14 = vector.extract_strided_slice %2 {offsets = [16, 0], sizes = [8, 128], strides = [1, 1]} : vector<64x128xf32> to vector<8x128xf32>
    %15 = arith.addf %13, %14 : vector<8x128xf32>
    %16 = math.tanh %15 : vector<8x128xf32>
    %cst_8 = arith.constant dense<0.000000e+00> : vector<8x128xf32>
    %17 = tpu.matmul %16, %3, %cst_8 {dimension_numbers = #tpu.dot_dimension_numbers<[1], [0], [0], [1], [0, 0, 1, 1], [], []>} : vector<8x128xf32>, vector<128x128xf32>, vector<8x128xf32> -> vector<8x128xf32>
    %18 = vector.extract_strided_slice %2 {offsets = [24, 0], sizes = [8, 128], strides = [1, 1]} : vector<64x128xf32> to vector<8x128xf32>
    %19 = arith.addf %17, %18 : vector<8x128xf32>
    %20 = math.tanh %19 : vector<8x128xf32>
    %cst_9 = arith.constant dense<0.000000e+00> : vector<8x128xf32>
    %21 = tpu.matmul %20, %3, %cst_9 {dimension_numbers = #tpu.dot_dimension_numbers<[1], [0], [0], [1], [0, 0, 1, 1], [], []>} : vector<8x128xf32>, vector<128x128xf32>, vector<8x128xf32> -> vector<8x128xf32>
    %22 = vector.extract_strided_slice %2 {offsets = [32, 0], sizes = [8, 128], strides = [1, 1]} : vector<64x128xf32> to vector<8x128xf32>
    %23 = arith.addf %21, %22 : vector<8x128xf32>
    %24 = math.tanh %23 : vector<8x128xf32>
    %cst_10 = arith.constant dense<0.000000e+00> : vector<8x128xf32>
    %25 = tpu.matmul %24, %3, %cst_10 {dimension_numbers = #tpu.dot_dimension_numbers<[1], [0], [0], [1], [0, 0, 1, 1], [], []>} : vector<8x128xf32>, vector<128x128xf32>, vector<8x128xf32> -> vector<8x128xf32>
    %26 = vector.extract_strided_slice %2 {offsets = [40, 0], sizes = [8, 128], strides = [1, 1]} : vector<64x128xf32> to vector<8x128xf32>
    %27 = arith.addf %25, %26 : vector<8x128xf32>
    %28 = math.tanh %27 : vector<8x128xf32>
    %cst_11 = arith.constant dense<0.000000e+00> : vector<8x128xf32>
    %29 = tpu.matmul %28, %3, %cst_11 {dimension_numbers = #tpu.dot_dimension_numbers<[1], [0], [0], [1], [0, 0, 1, 1], [], []>} : vector<8x128xf32>, vector<128x128xf32>, vector<8x128xf32> -> vector<8x128xf32>
    %30 = vector.extract_strided_slice %2 {offsets = [48, 0], sizes = [8, 128], strides = [1, 1]} : vector<64x128xf32> to vector<8x128xf32>
    %31 = arith.addf %29, %30 : vector<8x128xf32>
    %32 = math.tanh %31 : vector<8x128xf32>
    %cst_12 = arith.constant dense<0.000000e+00> : vector<8x128xf32>
    %33 = tpu.matmul %32, %3, %cst_12 {dimension_numbers = #tpu.dot_dimension_numbers<[1], [0], [0], [1], [0, 0, 1, 1], [], []>} : vector<8x128xf32>, vector<128x128xf32>, vector<8x128xf32> -> vector<8x128xf32>
    %34 = vector.extract_strided_slice %2 {offsets = [56, 0], sizes = [8, 128], strides = [1, 1]} : vector<64x128xf32> to vector<8x128xf32>
    %35 = arith.addf %33, %34 : vector<8x128xf32>
    %36 = math.tanh %35 : vector<8x128xf32>
    %c256 = arith.constant 256 : index
    %c0_13 = arith.constant 0 : index
    %37 = vector.load %arg1[%c256, %c0_13] : memref<392x128xf32, #tpu.memory_space<vmem>>, vector<128x128xf32>
    %cst_14 = arith.constant dense<0.000000e+00> : vector<8x128xf32>
    %38 = tpu.matmul %36, %37, %cst_14 {dimension_numbers = #tpu.dot_dimension_numbers<[1], [0], [0], [1], [0, 0, 1, 1], [], []>} : vector<8x128xf32>, vector<128x128xf32>, vector<8x128xf32> -> vector<8x128xf32>
    %c384 = arith.constant 384 : index
    %c0_15 = arith.constant 0 : index
    %39 = vector.load %arg1[%c384, %c0_15] : memref<392x128xf32, #tpu.memory_space<vmem>>, vector<1x128xf32>
    %40 = vector.broadcast %39 : vector<1x128xf32> to vector<8x128xf32>
    %41 = arith.addf %38, %40 : vector<8x128xf32>
    %c0_16 = arith.constant 0 : index
    %c0_17 = arith.constant 0 : index
    %42 = vector.load %arg2[%c0_16, %c0_17] : memref<8x128xf32, #tpu.memory_space<vmem>>, vector<8x128xf32>
    tpu.vector_store %arg2[%c0_16, %c0_17], %41 {strides = array<i32>} : memref<8x128xf32, #tpu.memory_space<vmem>>, vector<8x128xf32>,
    return
  }
}

</mosaic_0001>

<llo_original>
// kernel: tpu_custom_call.1
$region0: #{tpu_custom_call.1}
  #allocation0 [shape = 'u32[]', space=smem, size = 0x4, offset = 0x4, fixed_abs, tag = 'smem constant byte address 0x4 - core index']
  #allocation1 [shape = 'u32[144,128]{1,0:T(1,128)}', space=vmem, size = 0x12000, scoped, tag = 'internal scratch']
  %s0 = inlined_call_operand.hbm [shape: f32[64,128], index: 0, kind: input, shape index: {}]
  %s1 = inlined_call_operand.hbm [shape: f32[392,128], index: 1, kind: input, shape index: {}]
  %s2 = inlined_call_operand.hbm [shape: f32[8,128], index: 2, kind: output, shape index: {}]
  %s3 = sld [smem:[#allocation0]]
  $region26: #{tpu_custom_call.1} parent=0
    _
  %s5 = ssub.s32 1, %s3
  %s6 = scalar_select 0, %s5, %s3
  $region1: #{tpu_custom_call.1} parent=0
    #allocation2 [shape = 'u8[32768]{0}', space=vmem, size = 0x8000, scoped, tag = 'input window, operand 0, single buffered']
    #allocation3 [shape = 's32[1]{0}', space=sflag, size = 0x4, scoped, tag = 'scoped memory for tpu_custom_call.1']
    #allocation4 [shape = 's32[1]{0}', space=sflag, size = 0x4, scoped, tag = 'scoped memory for tpu_custom_call.1']
    #allocation5 [shape = 'u8[200704]{0}', space=vmem, size = 0x31000, scoped, tag = 'input window, operand 1, single buffered']
    #allocation6 [shape = 's32[1]{0}', space=sflag, size = 0x4, scoped, tag = 'scoped memory for tpu_custom_call.1']
    #allocation7 [shape = 'u8[4096]{0}', space=vmem, size = 0x1000, scoped, tag = 'output window, operand 0, single buffered']
    %7 = vsyncpa [#allocation3], 0
    %8 = vsyncpa [#allocation6], 0
    %9 = vsyncpa [#allocation4], 0
    // Predicated region
    $region2: #{tpu_custom_call.1} parent=1 // pred_check
      _
    $region3: #{tpu_custom_call.1} parent=1 // pred_check_branch
      %11 = sbr.rel (0) target = $region5
    $region4: #{tpu_custom_call.1} parent=1 // pred_region
      %s13 = ssub.s32 1024, 1024
      %14 = vsyncadd [#allocation3], %s13
      %s15 = sshll.u32 [#allocation2], 4
      %s16 = int_to_ptr.vmem [resolvable:$true] %s15
      %21 = dma.hbm_to_vmem [thread:$0]  %s0, 1024, %s16, [#allocation3], 128, 128, 8
    $region5: #{tpu_custom_call.1} parent=1 // pred_fallthru
      _
    // Predicated region
    $region6: #{tpu_custom_call.1} parent=1 // pred_check
      _
    $region7: #{tpu_custom_call.1} parent=1 // pred_check_branch
      %23 = sbr.rel (0) target = $region9
    $region8: #{tpu_custom_call.1} parent=1 // pred_region
      %s25 = ssub.s32 6272, 6272
      %26 = vsyncadd [#allocation6], %s25
      %s27 = sshll.u32 [#allocation5], 4
      %s28 = int_to_ptr.vmem [resolvable:$true] %s27
      %33 = dma.hbm_to_vmem [thread:$0]  %s1, 6272, %s28, [#allocation6], 128, 128, 8
    $region9: #{tpu_custom_call.1} parent=1 // pred_fallthru
      _
    // Predicated region
    $region10: #{tpu_custom_call.1} parent=1 // pred_check
      _
    $region11: #{tpu_custom_call.1} parent=1 // pred_check_branch
      %35 = sbr.rel (0) target = $region13
    $region12: #{tpu_custom_call.1} parent=1 // pred_region
      %36 = dma.done [#allocation3], 1024
    $region13: #{tpu_custom_call.1} parent=1 // pred_fallthru
      _
    // Predicated region
    $region14: #{tpu_custom_call.1} parent=1 // pred_check
      _
    $region15: #{tpu_custom_call.1} parent=1 // pred_check_branch
      %38 = sbr.rel (0) target = $region17
    $region16: #{tpu_custom_call.1} parent=1 // pred_region
      %39 = dma.done [#allocation6], 6272
    $region17: #{tpu_custom_call.1} parent=1 // pred_fallthru
      _
    %v40 = vld [vmem:[#allocation2] sm:$0xff]
    %v41 = vld [vmem:[#allocation2 + $0x8] sm:$0xff]
    %v42 = vld [vmem:[#allocation2 + $0x10] sm:$0xff]
    %v43 = vld [vmem:[#allocation2 + $0x18] sm:$0xff]
    %v44 = vld [vmem:[#allocation2 + $0x20] sm:$0xff]
    %v45 = vld [vmem:[#allocation2 + $0x28] sm:$0xff]
    %v46 = vld [vmem:[#allocation2 + $0x30] sm:$0xff]
    %v47 = vld [vmem:[#allocation2 + $0x38] sm:$0xff]
    %v48 = vld [vmem:[#allocation5] sm:$0xff]
    %v49 = vld [vmem:[#allocation5 + $0x8] sm:$0xff]
    %v50 = vld [vmem:[#allocation5 + $0x10] sm:$0xff]
    %v51 = vld [vmem:[#allocation5 + $0x18] sm:$0xff]
    %v52 = vld [vmem:[#allocation5 + $0x20] sm:$0xff]
    %v53 = vld [vmem:[#allocation5 + $0x28] sm:$0xff]
    %v54 = vld [vmem:[#allocation5 + $0x30] sm:$0xff]
    %v55 = vld [vmem:[#allocation5 + $0x38] sm:$0xff]
    %v56 = vld [vmem:[#allocation5 + $0x40] sm:$0xff]
    %v57 = vld [vmem:[#allocation5 + $0x48] sm:$0xff]
    %v58 = vld [vmem:[#allocation5 + $0x50] sm:$0xff]
    %v59 = vld [vmem:[#allocation5 + $0x58] sm:$0xff]
    %v60 = vld [vmem:[#allocation5 + $0x60] sm:$0xff]
    %v61 = vld [vmem:[#allocation5 + $0x68] sm:$0xff]
    %v62 = vld [vmem:[#allocation5 + $0x70] sm:$0xff]
    %v63 = vld [vmem:[#allocation5 + $0x78] sm:$0xff]
    %64 = vmatprep.subr.mxu0 0.0
    %65 = vmatpush1.msra.mxu0 %v63
    %66 = vmatprep.subr.mxu0 0.0
    %67 = vmatpush1.msra.mxu0 %v62
    %68 = vmatprep.subr.mxu0 0.0
    %69 = vmatpush1.msra.mxu0 %v61
    %70 = vmatprep.subr.mxu0 0.0
    %71 = vmatpush1.msra.mxu0 %v60
    %72 = vmatprep.subr.mxu0 0.0
    %73 = vmatpush1.msra.mxu0 %v59
    %74 = vmatprep.subr.mxu0 0.0
    %75 = vmatpush1.msra.mxu0 %v58
    %76 = vmatprep.subr.mxu0 0.0
    %77 = vmatpush1.msra.mxu0 %v57
    %78 = vmatprep.subr.mxu0 0.0
    %79 = vmatpush1.msra.mxu0 %v56
    %80 = vmatprep.subr.mxu0 0.0
    %81 = vmatpush1.msra.mxu0 %v55
    %82 = vmatprep.subr.mxu0 0.0
    %83 = vmatpush1.msra.mxu0 %v54
    %84 = vmatprep.subr.mxu0 0.0
    %85 = vmatpush1.msra.mxu0 %v53
    %86 = vmatprep.subr.mxu0 0.0
    %87 = vmatpush1.msra.mxu0 %v52
    %88 = vmatprep.subr.mxu0 0.0
    %89 = vmatpush1.msra.mxu0 %v51
    %90 = vmatprep.subr.mxu0 0.0
    %91 = vmatpush1.msra.mxu0 %v50
    %92 = vmatprep.subr.mxu0 0.0
    %93 = vmatpush1.msra.mxu0 %v49
    %94 = vmatprep.subr.mxu0 0.0
    %95 = vmatpush1.msra.mxu0 %v48
    %96 = vmatprep.subr.mxu0 0.0
    %97 = vmatpush2.msra.mxu0 0.0
    %98 = vmatprep.subr.mxu0 0.0
    %99 = vmatpush2.msra.mxu0 0.0
    %100 = vmatprep.subr.mxu0 0.0
    %101 = vmatpush2.msra.mxu0 0.0
    %102 = vmatprep.subr.mxu0 0.0
    %103 = vmatpush2.msra.mxu0 0.0
    %104 = vmatprep.subr.mxu0 0.0
    %105 = vmatpush2.msra.mxu0 0.0
    %106 = vmatprep.subr.mxu0 0.0
    %107 = vmatpush2.msra.mxu0 0.0
    %108 = vmatprep.subr.mxu0 0.0
    %109 = vmatpush2.msra.mxu0 0.0
    %110 = vmatprep.subr.mxu0 0.0
    %111 = vmatpush2.msra.mxu0 0.0
    %112 = vmatprep.subr.mxu0 0.0
    %113 = vmatpush2.msra.mxu0 0.0
    %114 = vmatprep.subr.mxu0 0.0
    %115 = vmatpush2.msra.mxu0 0.0
    %116 = vmatprep.subr.mxu0 0.0
    %117 = vmatpush2.msra.mxu0 0.0
    %118 = vmatprep.subr.mxu0 0.0
    %119 = vmatpush2.msra.mxu0 0.0
    %120 = vmatprep.subr.mxu0 0.0
    %121 = vmatpush2.msra.mxu0 0.0
    %122 = vmatprep.subr.mxu0 0.0
    %123 = vmatpush2.msra.mxu0 0.0
    %124 = vmatprep.subr.mxu0 0.0
    %125 = vmatpush2.msra.mxu0 0.0
    %126 = vmatprep.subr.mxu0 0.0
    %127 = vmatpush2.msra.mxu0 0.0
    %128 = vmatprep.mubr.f32.mxu0 0.0
    %129 = vmatmul.mubr.f32.gmra.mxu0 %v40
    %v130 = vpop.f32.mrf.mxu0
    %v131 = vadd.f32 0.0, %v130
    %v132 = vpop.f32.mrf.mxu0
    %133 = vmatprep.mubr.f32.mxu0 0.0
    %134 = vmatmul.mubr.f32.gmra.mxu0 %v41
    %v135 = vpop.f32.mrf.mxu0
    %v136 = vadd.f32 0.0, %v135
    %v137 = vpop.f32.mrf.mxu0
    %138 = vmatprep.mubr.f32.mxu0 0.0
    %139 = vmatmul.mubr.f32.gmra.mxu0 %v42
    %v140 = vpop.f32.mrf.mxu0
    %v141 = vadd.f32 0.0, %v140
    %v142 = vpop.f32.mrf.mxu0
    %143 = vmatprep.mubr.f32.mxu0 0.0
    %144 = vmatmul.mubr.f32.gmra.mxu0 %v43
    %v145 = vpop.f32.mrf.mxu0
    %v146 = vadd.f32 0.0, %v145
    %v147 = vpop.f32.mrf.mxu0
    %148 = vmatprep.mubr.f32.mxu0 0.0
    %149 = vmatmul.mubr.f32.gmra.mxu0 %v44
    %v150 = vpop.f32.mrf.mxu0
    %v151 = vadd.f32 0.0, %v150
    %v152 = vpop.f32.mrf.mxu0
    %153 = vmatprep.mubr.f32.mxu0 0.0
    %154 = vmatmul.mubr.f32.gmra.mxu0 %v45
    %v155 = vpop.f32.mrf.mxu0
    %v156 = vadd.f32 0.0, %v155
    %v157 = vpop.f32.mrf.mxu0
    %158 = vmatprep.mubr.f32.mxu0 0.0
    %159 = vmatmul.mubr.f32.gmra.mxu0 %v46
    %v160 = vpop.f32.mrf.mxu0
    %v161 = vadd.f32 0.0, %v160
    %v162 = vpop.f32.mrf.mxu0
    %163 = vmatprep.mubr.f32.mxu0 0.0
    %164 = vmatmul.mubr.f32.gmra.mxu0 %v47
    %v165 = vpop.f32.mrf.mxu0
    %v166 = vadd.f32 0.0, %v165
    %v167 = vpop.f32.mrf.mxu0
    %168 = vdwg.mxu0
    %v169 = vld [vmem:[#allocation5 + $0x80] sm:$0xff]
    %v170 = vld [vmem:[#allocation5 + $0x88] sm:$0xff]
    %v171 = vld [vmem:[#allocation5 + $0x90] sm:$0xff]
    %v172 = vld [vmem:[#allocation5 + $0x98] sm:$0xff]
    %v173 = vld [vmem:[#allocation5 + $0xa0] sm:$0xff]
    %v174 = vld [vmem:[#allocation5 + $0xa8] sm:$0xff]
    %v175 = vld [vmem:[#allocation5 + $0xb0] sm:$0xff]
    %v176 = vld [vmem:[#allocation5 + $0xb8] sm:$0xff]
    %v177 = vld [vmem:[#allocation5 + $0xc0] sm:$0xff]
    %v178 = vld [vmem:[#allocation5 + $0xc8] sm:$0xff]
    %v179 = vld [vmem:[#allocation5 + $0xd0] sm:$0xff]
    %v180 = vld [vmem:[#allocation5 + $0xd8] sm:$0xff]
    %v181 = vld [vmem:[#allocation5 + $0xe0] sm:$0xff]
    %v182 = vld [vmem:[#allocation5 + $0xe8] sm:$0xff]
    %v183 = vld [vmem:[#allocation5 + $0xf0] sm:$0xff]
    %v184 = vld [vmem:[#allocation5 + $0xf8] sm:$0xff]
    %185 = vmatprep.subr.mxu0 0.0
    %186 = vmatpush1.msra.mxu0 %v184
    %187 = vmatprep.subr.mxu0 0.0
    %188 = vmatpush1.msra.mxu0 %v183
    %189 = vmatprep.subr.mxu0 0.0
    %190 = vmatpush1.msra.mxu0 %v182
    %191 = vmatprep.subr.mxu0 0.0
    %192 = vmatpush1.msra.mxu0 %v181
    %193 = vmatprep.subr.mxu0 0.0
    %194 = vmatpush1.msra.mxu0 %v180
    %195 = vmatprep.subr.mxu0 0.0
    %196 = vmatpush1.msra.mxu0 %v179
    %197 = vmatprep.subr.mxu0 0.0
    %198 = vmatpush1.msra.mxu0 %v178
    %199 = vmatprep.subr.mxu0 0.0
    %200 = vmatpush1.msra.mxu0 %v177
    %201 = vmatprep.subr.mxu0 0.0
    %202 = vmatpush1.msra.mxu0 %v176
    %203 = vmatprep.subr.mxu0 0.0
    %204 = vmatpush1.msra.mxu0 %v175
    %205 = vmatprep.subr.mxu0 0.0
    %206 = vmatpush1.msra.mxu0 %v174
    %207 = vmatprep.subr.mxu0 0.0
    %208 = vmatpush1.msra.mxu0 %v173
    %209 = vmatprep.subr.mxu0 0.0
    %210 = vmatpush1.msra.mxu0 %v172
    %211 = vmatprep.subr.mxu0 0.0
    %212 = vmatpush1.msra.mxu0 %v171
    %213 = vmatprep.subr.mxu0 0.0
    %214 = vmatpush1.msra.mxu0 %v170
    %215 = vmatprep.subr.mxu0 0.0
    %216 = vmatpush1.msra.mxu0 %v169
    %217 = vmatprep.subr.mxu0 0.0
    %218 = vmatpush2.msra.mxu0 0.0
    %219 = vmatprep.subr.mxu0 0.0
    %220 = vmatpush2.msra.mxu0 0.0
    %221 = vmatprep.subr.mxu0 0.0
    %222 = vmatpush2.msra.mxu0 0.0
    %223 = vmatprep.subr.mxu0 0.0
    %224 = vmatpush2.msra.mxu0 0.0
    %225 = vmatprep.subr.mxu0 0.0
    %226 = vmatpush2.msra.mxu0 0.0
    %227 = vmatprep.subr.mxu0 0.0
    %228 = vmatpush2.msra.mxu0 0.0
    %229 = vmatprep.subr.mxu0 0.0
    %230 = vmatpush2.msra.mxu0 0.0
    %231 = vmatprep.subr.mxu0 0.0
    %232 = vmatpush2.msra.mxu0 0.0
    %233 = vmatprep.subr.mxu0 0.0
    %234 = vmatpush2.msra.mxu0 0.0
    %235 = vmatprep.subr.mxu0 0.0
    %236 = vmatpush2.msra.mxu0 0.0
    %237 = vmatprep.subr.mxu0 0.0
    %238 = vmatpush2.msra.mxu0 0.0
    %239 = vmatprep.subr.mxu0 0.0
    %240 = vmatpush2.msra.mxu0 0.0
    %241 = vmatprep.subr.mxu0 0.0
    %242 = vmatpush2.msra.mxu0 0.0
    %243 = vmatprep.subr.mxu0 0.0
    %244 = vmatpush2.msra.mxu0 0.0
    %245 = vmatprep.subr.mxu0 0.0
    %246 = vmatpush2.msra.mxu0 0.0
    %247 = vmatprep.subr.mxu0 0.0
    %248 = vmatpush2.msra.mxu0 0.0
    %249 = vmatprep.mubr.f32.mxu0 0.0
    %250 = vmatmul.mubr.f32.gmra.mxu0 0.0
    %v251 = vpop.f32.mrf.mxu0
    %v252 = vadd.f32 %v131, %v251
    %v253 = vpop.f32.mrf.mxu0
    %254 = vdwg.mxu0
    %v255 = vtanh.pop %v252
    %256 = vmatprep.subr.mxu0 0.0
    %257 = vmatpush1.msra.mxu0 %v184
    %258 = vmatprep.subr.mxu0 0.0
    %259 = vmatpush1.msra.mxu0 %v183
    %260 = vmatprep.subr.mxu0 0.0
    %261 = vmatpush1.msra.mxu0 %v182
    %262 = vmatprep.subr.mxu0 0.0
    %263 = vmatpush1.msra.mxu0 %v181
    %264 = vmatprep.subr.mxu0 0.0
    %265 = vmatpush1.msra.mxu0 %v180
    %266 = vmatprep.subr.mxu0 0.0
    %267 = vmatpush1.msra.mxu0 %v179
    %268 = vmatprep.subr.mxu0 0.0
    %269 = vmatpush1.msra.mxu0 %v178
    %270 = vmatprep.subr.mxu0 0.0
    %271 = vmatpush1.msra.mxu0 %v177
    %272 = vmatprep.subr.mxu0 0.0
    %273 = vmatpush1.msra.mxu0 %v176
    %274 = vmatprep.subr.mxu0 0.0
    %275 = vmatpush1.msra.mxu0 %v175
    %276 = vmatprep.subr.mxu0 0.0
    %277 = vmatpush1.msra.mxu0 %v174
    %278 = vmatprep.subr.mxu0 0.0
    %279 = vmatpush1.msra.mxu0 %v173
    %280 = vmatprep.subr.mxu0 0.0
    %281 = vmatpush1.msra.mxu0 %v172
    %282 = vmatprep.subr.mxu0 0.0
    %283 = vmatpush1.msra.mxu0 %v171
    %284 = vmatprep.subr.mxu0 0.0
    %285 = vmatpush1.msra.mxu0 %v170
    %286 = vmatprep.subr.mxu0 0.0
    %287 = vmatpush1.msra.mxu0 %v169
    %288 = vmatprep.subr.mxu0 0.0
    %289 = vmatpush2.msra.mxu0 0.0
    %290 = vmatprep.subr.mxu0 0.0
    %291 = vmatpush2.msra.mxu0 0.0
    %292 = vmatprep.subr.mxu0 0.0
    %293 = vmatpush2.msra.mxu0 0.0
    %294 = vmatprep.subr.mxu0 0.0
    %295 = vmatpush2.msra.mxu0 0.0
    %296 = vmatprep.subr.mxu0 0.0
    %297 = vmatpush2.msra.mxu0 0.0
    %298 = vmatprep.subr.mxu0 0.0
    %299 = vmatpush2.msra.mxu0 0.0
    %300 = vmatprep.subr.mxu0 0.0
    %301 = vmatpush2.msra.mxu0 0.0
    %302 = vmatprep.subr.mxu0 0.0
    %303 = vmatpush2.msra.mxu0 0.0
    %304 = vmatprep.subr.mxu0 0.0
    %305 = vmatpush2.msra.mxu0 0.0
    %306 = vmatprep.subr.mxu0 0.0
    %307 = vmatpush2.msra.mxu0 0.0
    %308 = vmatprep.subr.mxu0 0.0
    %309 = vmatpush2.msra.mxu0 0.0
    %310 = vmatprep.subr.mxu0 0.0
    %311 = vmatpush2.msra.mxu0 0.0
    %312 = vmatprep.subr.mxu0 0.0
    %313 = vmatpush2.msra.mxu0 0.0
    %314 = vmatprep.subr.mxu0 0.0
    %315 = vmatpush2.msra.mxu0 0.0
    %316 = vmatprep.subr.mxu0 0.0
    %317 = vmatpush2.msra.mxu0 0.0
    %318 = vmatprep.subr.mxu0 0.0
    %319 = vmatpush2.msra.mxu0 0.0
    %320 = vmatprep.mubr.f32.mxu0 0.0
    %321 = vmatmul.mubr.f32.gmra.mxu0 %v255
    %v322 = vpop.f32.mrf.mxu0
    %v323 = vadd.f32 %v136, %v322
    %v324 = vpop.f32.mrf.mxu0
    %325 = vdwg.mxu0
    %v326 = vtanh.pop %v323
    %327 = vmatprep.subr.mxu0 0.0
    %328 = vmatpush1.msra.mxu0 %v184
    %329 = vmatprep.subr.mxu0 0.0
    %330 = vmatpush1.msra.mxu0 %v183
    %331 = vmatprep.subr.mxu0 0.0
    %332 = vmatpush1.msra.mxu0 %v182
    %333 = vmatprep.subr.mxu0 0.0
    %334 = vmatpush1.msra.mxu0 %v181
    %335 = vmatprep.subr.mxu0 0.0
    %336 = vmatpush1.msra.mxu0 %v180
    %337 = vmatprep.subr.mxu0 0.0
    %338 = vmatpush1.msra.mxu0 %v179
    %339 = vmatprep.subr.mxu0 0.0
    %340 = vmatpush1.msra.mxu0 %v178
    %341 = vmatprep.subr.mxu0 0.0
    %342 = vmatpush1.msra.mxu0 %v177
    %343 = vmatprep.subr.mxu0 0.0
    %344 = vmatpush1.msra.mxu0 %v176
    %345 = vmatprep.subr.mxu0 0.0
    %346 = vmatpush1.msra.mxu0 %v175
    %347 = vmatprep.subr.mxu0 0.0
    %348 = vmatpush1.msra.mxu0 %v174
    %349 = vmatprep.subr.mxu0 0.0
    %350 = vmatpush1.msra.mxu0 %v173
    %351 = vmatprep.subr.mxu0 0.0
    %352 = vmatpush1.msra.mxu0 %v172
    %353 = vmatprep.subr.mxu0 0.0
    %354 = vmatpush1.msra.mxu0 %v171
    %355 = vmatprep.subr.mxu0 0.0
    %356 = vmatpush1.msra.mxu0 %v170
    %357 = vmatprep.subr.mxu0 0.0
    %358 = vmatpush1.msra.mxu0 %v169
    %359 = vmatprep.subr.mxu0 0.0
    %360 = vmatpush2.msra.mxu0 0.0
    %361 = vmatprep.subr.mxu0 0.0
    %362 = vmatpush2.msra.mxu0 0.0
    %363 = vmatprep.subr.mxu0 0.0
    %364 = vmatpush2.msra.mxu0 0.0
    %365 = vmatprep.subr.mxu0 0.0
    %366 = vmatpush2.msra.mxu0 0.0
    %367 = vmatprep.subr.mxu0 0.0
    %368 = vmatpush2.msra.mxu0 0.0
    %369 = vmatprep.subr.mxu0 0.0
    %370 = vmatpush2.msra.mxu0 0.0
    %371 = vmatprep.subr.mxu0 0.0
    %372 = vmatpush2.msra.mxu0 0.0
    %373 = vmatprep.subr.mxu0 0.0
    %374 = vmatpush2.msra.mxu0 0.0
    %375 = vmatprep.subr.mxu0 0.0
    %376 = vmatpush2.msra.mxu0 0.0
    %377 = vmatprep.subr.mxu0 0.0
    %378 = vmatpush2.msra.mxu0 0.0
    %379 = vmatprep.subr.mxu0 0.0
    %380 = vmatpush2.msra.mxu0 0.0
    %381 = vmatprep.subr.mxu0 0.0
    %382 = vmatpush2.msra.mxu0 0.0
    %383 = vmatprep.subr.mxu0 0.0
    %384 = vmatpush2.msra.mxu0 0.0
    %385 = vmatprep.subr.mxu0 0.0
    %386 = vmatpush2.msra.mxu0 0.0
    %387 = vmatprep.subr.mxu0 0.0
    %388 = vmatpush2.msra.mxu0 0.0
    %389 = vmatprep.subr.mxu0 0.0
    %390 = vmatpush2.msra.mxu0 0.0
    %391 = vmatprep.mubr.f32.mxu0 0.0
    %392 = vmatmul.mubr.f32.gmra.mxu0 %v326
    %v393 = vpop.f32.mrf.mxu0
    %v394 = vadd.f32 %v141, %v393
    %v395 = vpop.f32.mrf.mxu0
    %396 = vdwg.mxu0
    %v397 = vtanh.pop %v394
    %398 = vmatprep.subr.mxu0 0.0
    %399 = vmatpush1.msra.mxu0 %v184
    %400 = vmatprep.subr.mxu0 0.0
    %401 = vmatpush1.msra.mxu0 %v183
    %402 = vmatprep.subr.mxu0 0.0
    %403 = vmatpush1.msra.mxu0 %v182
    %404 = vmatprep.subr.mxu0 0.0
    %405 = vmatpush1.msra.mxu0 %v181
    %406 = vmatprep.subr.mxu0 0.0
    %407 = vmatpush1.msra.mxu0 %v180
    %408 = vmatprep.subr.mxu0 0.0
    %409 = vmatpush1.msra.mxu0 %v179
    %410 = vmatprep.subr.mxu0 0.0
    %411 = vmatpush1.msra.mxu0 %v178
    %412 = vmatprep.subr.mxu0 0.0
    %413 = vmatpush1.msra.mxu0 %v177
    %414 = vmatprep.subr.mxu0 0.0
    %415 = vmatpush1.msra.mxu0 %v176
    %416 = vmatprep.subr.mxu0 0.0
    %417 = vmatpush1.msra.mxu0 %v175
    %418 = vmatprep.subr.mxu0 0.0
    %419 = vmatpush1.msra.mxu0 %v174
    %420 = vmatprep.subr.mxu0 0.0
    %421 = vmatpush1.msra.mxu0 %v173
    %422 = vmatprep.subr.mxu0 0.0
    %423 = vmatpush1.msra.mxu0 %v172
    %424 = vmatprep.subr.mxu0 0.0
    %425 = vmatpush1.msra.mxu0 %v171
    %426 = vmatprep.subr.mxu0 0.0
    %427 = vmatpush1.msra.mxu0 %v170
    %428 = vmatprep.subr.mxu0 0.0
    %429 = vmatpush1.msra.mxu0 %v169
    %430 = vmatprep.subr.mxu0 0.0
    %431 = vmatpush2.msra.mxu0 0.0
    %432 = vmatprep.subr.mxu0 0.0
    %433 = vmatpush2.msra.mxu0 0.0
    %434 = vmatprep.subr.mxu0 0.0
    %435 = vmatpush2.msra.mxu0 0.0
    %436 = vmatprep.subr.mxu0 0.0
    %437 = vmatpush2.msra.mxu0 0.0
    %438 = vmatprep.subr.mxu0 0.0
    %439 = vmatpush2.msra.mxu0 0.0
    %440 = vmatprep.subr.mxu0 0.0
    %441 = vmatpush2.msra.mxu0 0.0
    %442 = vmatprep.subr.mxu0 0.0
    %443 = vmatpush2.msra.mxu0 0.0
    %444 = vmatprep.subr.mxu0 0.0
    %445 = vmatpush2.msra.mxu0 0.0
    %446 = vmatprep.subr.mxu0 0.0
    %447 = vmatpush2.msra.mxu0 0.0
    %448 = vmatprep.subr.mxu0 0.0
    %449 = vmatpush2.msra.mxu0 0.0
    %450 = vmatprep.subr.mxu0 0.0
    %451 = vmatpush2.msra.mxu0 0.0
    %452 = vmatprep.subr.mxu0 0.0
    %453 = vmatpush2.msra.mxu0 0.0
    %454 = vmatprep.subr.mxu0 0.0
    %455 = vmatpush2.msra.mxu0 0.0
    %456 = vmatprep.subr.mxu0 0.0
    %457 = vmatpush2.msra.mxu0 0.0
    %458 = vmatprep.subr.mxu0 0.0
    %459 = vmatpush2.msra.mxu0 0.0
    %460 = vmatprep.subr.mxu0 0.0
    %461 = vmatpush2.msra.mxu0 0.0
    %462 = vmatprep.mubr.f32.mxu0 0.0
    %463 = vmatmul.mubr.f32.gmra.mxu0 %v397
    %v464 = vpop.f32.mrf.mxu0
    %v465 = vadd.f32 %v146, %v464
    %v466 = vpop.f32.mrf.mxu0
    %467 = vdwg.mxu0
    %v468 = vtanh.pop %v465
    %469 = vmatprep.subr.mxu0 0.0
    %470 = vmatpush1.msra.mxu0 %v184
    %471 = vmatprep.subr.mxu0 0.0
    %472 = vmatpush1.msra.mxu0 %v183
    %473 = vmatprep.subr.mxu0 0.0
    %474 = vmatpush1.msra.mxu0 %v182
    %475 = vmatprep.subr.mxu0 0.0
    %476 = vmatpush1.msra.mxu0 %v181
    %477 = vmatprep.subr.mxu0 0.0
    %478 = vmatpush1.msra.mxu0 %v180
    %479 = vmatprep.subr.mxu0 0.0
    %480 = vmatpush1.msra.mxu0 %v179
    %481 = vmatprep.subr.mxu0 0.0
    %482 = vmatpush1.msra.mxu0 %v178
    %483 = vmatprep.subr.mxu0 0.0
    %484 = vmatpush1.msra.mxu0 %v177
    %485 = vmatprep.subr.mxu0 0.0
    %486 = vmatpush1.msra.mxu0 %v176
    %487 = vmatprep.subr.mxu0 0.0
    %488 = vmatpush1.msra.mxu0 %v175
    %489 = vmatprep.subr.mxu0 0.0
    %490 = vmatpush1.msra.mxu0 %v174
    %491 = vmatprep.subr.mxu0 0.0
    %492 = vmatpush1.msra.mxu0 %v173
    %493 = vmatprep.subr.mxu0 0.0
    %494 = vmatpush1.msra.mxu0 %v172
    %495 = vmatprep.subr.mxu0 0.0
    %496 = vmatpush1.msra.mxu0 %v171
    %497 = vmatprep.subr.mxu0 0.0
    %498 = vmatpush1.msra.mxu0 %v170
    %499 = vmatprep.subr.mxu0 0.0
    %500 = vmatpush1.msra.mxu0 %v169
    %501 = vmatprep.subr.mxu0 0.0
    %502 = vmatpush2.msra.mxu0 0.0
    %503 = vmatprep.subr.mxu0 0.0
    %504 = vmatpush2.msra.mxu0 0.0
    %505 = vmatprep.subr.mxu0 0.0
    %506 = vmatpush2.msra.mxu0 0.0
    %507 = vmatprep.subr.mxu0 0.0
    %508 = vmatpush2.msra.mxu0 0.0
    %509 = vmatprep.subr.mxu0 0.0
    %510 = vmatpush2.msra.mxu0 0.0
    %511 = vmatprep.subr.mxu0 0.0
    %512 = vmatpush2.msra.mxu0 0.0
    %513 = vmatprep.subr.mxu0 0.0
    %514 = vmatpush2.msra.mxu0 0.0
    %515 = vmatprep.subr.mxu0 0.0
    %516 = vmatpush2.msra.mxu0 0.0
    %517 = vmatprep.subr.mxu0 0.0
    %518 = vmatpush2.msra.mxu0 0.0
    %519 = vmatprep.subr.mxu0 0.0
    %520 = vmatpush2.msra.mxu0 0.0
    %521 = vmatprep.subr.mxu0 0.0
    %522 = vmatpush2.msra.mxu0 0.0
    %523 = vmatprep.subr.mxu0 0.0
    %524 = vmatpush2.msra.mxu0 0.0
    %525 = vmatprep.subr.mxu0 0.0
    %526 = vmatpush2.msra.mxu0 0.0
    %527 = vmatprep.subr.mxu0 0.0
    %528 = vmatpush2.msra.mxu0 0.0
    %529 = vmatprep.subr.mxu0 0.0
    %530 = vmatpush2.msra.mxu0 0.0
    %531 = vmatprep.subr.mxu0 0.0
    %532 = vmatpush2.msra.mxu0 0.0
    %533 = vmatprep.mubr.f32.mxu0 0.0
    %534 = vmatmul.mubr.f32.gmra.mxu0 %v468
    %v535 = vpop.f32.mrf.mxu0
    %v536 = vadd.f32 %v151, %v535
    %v537 = vpop.f32.mrf.mxu0
    %538 = vdwg.mxu0
    %v539 = vtanh.pop %v536
    %540 = vmatprep.subr.mxu0 0.0
    %541 = vmatpush1.msra.mxu0 %v184
    %542 = vmatprep.subr.mxu0 0.0
    %543 = vmatpush1.msra.mxu0 %v183
    %544 = vmatprep.subr.mxu0 0.0
    %545 = vmatpush1.msra.mxu0 %v182
    %546 = vmatprep.subr.mxu0 0.0
    %547 = vmatpush1.msra.mxu0 %v181
    %548 = vmatprep.subr.mxu0 0.0
    %549 = vmatpush1.msra.mxu0 %v180
    %550 = vmatprep.subr.mxu0 0.0
    %551 = vmatpush1.msra.mxu0 %v179
    %552 = vmatprep.subr.mxu0 0.0
    %553 = vmatpush1.msra.mxu0 %v178
    %554 = vmatprep.subr.mxu0 0.0
    %555 = vmatpush1.msra.mxu0 %v177
    %556 = vmatprep.subr.mxu0 0.0
    %557 = vmatpush1.msra.mxu0 %v176
    %558 = vmatprep.subr.mxu0 0.0
    %559 = vmatpush1.msra.mxu0 %v175
    %560 = vmatprep.subr.mxu0 0.0
    %561 = vmatpush1.msra.mxu0 %v174
    %562 = vmatprep.subr.mxu0 0.0
    %563 = vmatpush1.msra.mxu0 %v173
    %564 = vmatprep.subr.mxu0 0.0
    %565 = vmatpush1.msra.mxu0 %v172
    %566 = vmatprep.subr.mxu0 0.0
    %567 = vmatpush1.msra.mxu0 %v171
    %568 = vmatprep.subr.mxu0 0.0
    %569 = vmatpush1.msra.mxu0 %v170
    %570 = vmatprep.subr.mxu0 0.0
    %571 = vmatpush1.msra.mxu0 %v169
    %572 = vmatprep.subr.mxu0 0.0
    %573 = vmatpush2.msra.mxu0 0.0
    %574 = vmatprep.subr.mxu0 0.0
    %575 = vmatpush2.msra.mxu0 0.0
    %576 = vmatprep.subr.mxu0 0.0
    %577 = vmatpush2.msra.mxu0 0.0
    %578 = vmatprep.subr.mxu0 0.0
    %579 = vmatpush2.msra.mxu0 0.0
    %580 = vmatprep.subr.mxu0 0.0
    %581 = vmatpush2.msra.mxu0 0.0
    %582 = vmatprep.subr.mxu0 0.0
    %583 = vmatpush2.msra.mxu0 0.0
    %584 = vmatprep.subr.mxu0 0.0
    %585 = vmatpush2.msra.mxu0 0.0
    %586 = vmatprep.subr.mxu0 0.0
    %587 = vmatpush2.msra.mxu0 0.0
    %588 = vmatprep.subr.mxu0 0.0
    %589 = vmatpush2.msra.mxu0 0.0
    %590 = vmatprep.subr.mxu0 0.0
    %591 = vmatpush2.msra.mxu0 0.0
    %592 = vmatprep.subr.mxu0 0.0
    %593 = vmatpush2.msra.mxu0 0.0
    %594 = vmatprep.subr.mxu0 0.0
    %595 = vmatpush2.msra.mxu0 0.0
    %596 = vmatprep.subr.mxu0 0.0
    %597 = vmatpush2.msra.mxu0 0.0
    %598 = vmatprep.subr.mxu0 0.0
    %599 = vmatpush2.msra.mxu0 0.0
    %600 = vmatprep.subr.mxu0 0.0
    %601 = vmatpush2.msra.mxu0 0.0
    %602 = vmatprep.subr.mxu0 0.0
    %603 = vmatpush2.msra.mxu0 0.0
    %604 = vmatprep.mubr.f32.mxu0 0.0
    %605 = vmatmul.mubr.f32.gmra.mxu0 %v539
    %v606 = vpop.f32.mrf.mxu0
    %v607 = vadd.f32 %v156, %v606
    %v608 = vpop.f32.mrf.mxu0
    %609 = vdwg.mxu0
    %v610 = vtanh.pop %v607
    %611 = vmatprep.subr.mxu0 0.0
    %612 = vmatpush1.msra.mxu0 %v184
    %613 = vmatprep.subr.mxu0 0.0
    %614 = vmatpush1.msra.mxu0 %v183
    %615 = vmatprep.subr.mxu0 0.0
    %616 = vmatpush1.msra.mxu0 %v182
    %617 = vmatprep.subr.mxu0 0.0
    %618 = vmatpush1.msra.mxu0 %v181
    %619 = vmatprep.subr.mxu0 0.0
    %620 = vmatpush1.msra.mxu0 %v180
    %621 = vmatprep.subr.mxu0 0.0
    %622 = vmatpush1.msra.mxu0 %v179
    %623 = vmatprep.subr.mxu0 0.0
    %624 = vmatpush1.msra.mxu0 %v178
    %625 = vmatprep.subr.mxu0 0.0
    %626 = vmatpush1.msra.mxu0 %v177
    %627 = vmatprep.subr.mxu0 0.0
    %628 = vmatpush1.msra.mxu0 %v176
    %629 = vmatprep.subr.mxu0 0.0
    %630 = vmatpush1.msra.mxu0 %v175
    %631 = vmatprep.subr.mxu0 0.0
    %632 = vmatpush1.msra.mxu0 %v174
    %633 = vmatprep.subr.mxu0 0.0
    %634 = vmatpush1.msra.mxu0 %v173
    %635 = vmatprep.subr.mxu0 0.0
    %636 = vmatpush1.msra.mxu0 %v172
    %637 = vmatprep.subr.mxu0 0.0
    %638 = vmatpush1.msra.mxu0 %v171
    %639 = vmatprep.subr.mxu0 0.0
    %640 = vmatpush1.msra.mxu0 %v170
    %641 = vmatprep.subr.mxu0 0.0
    %642 = vmatpush1.msra.mxu0 %v169
    %643 = vmatprep.subr.mxu0 0.0
    %644 = vmatpush2.msra.mxu0 0.0
    %645 = vmatprep.subr.mxu0 0.0
    %646 = vmatpush2.msra.mxu0 0.0
    %647 = vmatprep.subr.mxu0 0.0
    %648 = vmatpush2.msra.mxu0 0.0
    %649 = vmatprep.subr.mxu0 0.0
    %650 = vmatpush2.msra.mxu0 0.0
    %651 = vmatprep.subr.mxu0 0.0
    %652 = vmatpush2.msra.mxu0 0.0
    %653 = vmatprep.subr.mxu0 0.0
    %654 = vmatpush2.msra.mxu0 0.0
    %655 = vmatprep.subr.mxu0 0.0
    %656 = vmatpush2.msra.mxu0 0.0
    %657 = vmatprep.subr.mxu0 0.0
    %658 = vmatpush2.msra.mxu0 0.0
    %659 = vmatprep.subr.mxu0 0.0
    %660 = vmatpush2.msra.mxu0 0.0
    %661 = vmatprep.subr.mxu0 0.0
    %662 = vmatpush2.msra.mxu0 0.0
    %663 = vmatprep.subr.mxu0 0.0
    %664 = vmatpush2.msra.mxu0 0.0
    %665 = vmatprep.subr.mxu0 0.0
    %666 = vmatpush2.msra.mxu0 0.0
    %667 = vmatprep.subr.mxu0 0.0
    %668 = vmatpush2.msra.mxu0 0.0
    %669 = vmatprep.subr.mxu0 0.0
    %670 = vmatpush2.msra.mxu0 0.0
    %671 = vmatprep.subr.mxu0 0.0
    %672 = vmatpush2.msra.mxu0 0.0
    %673 = vmatprep.subr.mxu0 0.0
    %674 = vmatpush2.msra.mxu0 0.0
    %675 = vmatprep.mubr.f32.mxu0 0.0
    %676 = vmatmul.mubr.f32.gmra.mxu0 %v610
    %v677 = vpop.f32.mrf.mxu0
    %v678 = vadd.f32 %v161, %v677
    %v679 = vpop.f32.mrf.mxu0
    %680 = vdwg.mxu0
    %v681 = vtanh.pop %v678
    %682 = vmatprep.subr.mxu0 0.0
    %683 = vmatpush1.msra.mxu0 %v184
    %684 = vmatprep.subr.mxu0 0.0
    %685 = vmatpush1.msra.mxu0 %v183
    %686 = vmatprep.subr.mxu0 0.0
    %687 = vmatpush1.msra.mxu0 %v182
    %688 = vmatprep.subr.mxu0 0.0
    %689 = vmatpush1.msra.mxu0 %v181
    %690 = vmatprep.subr.mxu0 0.0
    %691 = vmatpush1.msra.mxu0 %v180
    %692 = vmatprep.subr.mxu0 0.0
    %693 = vmatpush1.msra.mxu0 %v179
    %694 = vmatprep.subr.mxu0 0.0
    %695 = vmatpush1.msra.mxu0 %v178
    %696 = vmatprep.subr.mxu0 0.0
    %697 = vmatpush1.msra.mxu0 %v177
    %698 = vmatprep.subr.mxu0 0.0
    %699 = vmatpush1.msra.mxu0 %v176
    %700 = vmatprep.subr.mxu0 0.0
    %701 = vmatpush1.msra.mxu0 %v175
    %702 = vmatprep.subr.mxu0 0.0
    %703 = vmatpush1.msra.mxu0 %v174
    %704 = vmatprep.subr.mxu0 0.0
    %705 = vmatpush1.msra.mxu0 %v173
    %706 = vmatprep.subr.mxu0 0.0
    %707 = vmatpush1.msra.mxu0 %v172
    %708 = vmatprep.subr.mxu0 0.0
    %709 = vmatpush1.msra.mxu0 %v171
    %710 = vmatprep.subr.mxu0 0.0
    %711 = vmatpush1.msra.mxu0 %v170
    %712 = vmatprep.subr.mxu0 0.0
    %713 = vmatpush1.msra.mxu0 %v169
    %714 = vmatprep.subr.mxu0 0.0
    %715 = vmatpush2.msra.mxu0 0.0
    %716 = vmatprep.subr.mxu0 0.0
    %717 = vmatpush2.msra.mxu0 0.0
    %718 = vmatprep.subr.mxu0 0.0
    %719 = vmatpush2.msra.mxu0 0.0
    %720 = vmatprep.subr.mxu0 0.0
    %721 = vmatpush2.msra.mxu0 0.0
    %722 = vmatprep.subr.mxu0 0.0
    %723 = vmatpush2.msra.mxu0 0.0
    %724 = vmatprep.subr.mxu0 0.0
    %725 = vmatpush2.msra.mxu0 0.0
    %726 = vmatprep.subr.mxu0 0.0
    %727 = vmatpush2.msra.mxu0 0.0
    %728 = vmatprep.subr.mxu0 0.0
    %729 = vmatpush2.msra.mxu0 0.0
    %730 = vmatprep.subr.mxu0 0.0
    %731 = vmatpush2.msra.mxu0 0.0
    %732 = vmatprep.subr.mxu0 0.0
    %733 = vmatpush2.msra.mxu0 0.0
    %734 = vmatprep.subr.mxu0 0.0
    %735 = vmatpush2.msra.mxu0 0.0
    %736 = vmatprep.subr.mxu0 0.0
    %737 = vmatpush2.msra.mxu0 0.0
    %738 = vmatprep.subr.mxu0 0.0
    %739 = vmatpush2.msra.mxu0 0.0
    %740 = vmatprep.subr.mxu0 0.0
    %741 = vmatpush2.msra.mxu0 0.0
    %742 = vmatprep.subr.mxu0 0.0
    %743 = vmatpush2.msra.mxu0 0.0
    %744 = vmatprep.subr.mxu0 0.0
    %745 = vmatpush2.msra.mxu0 0.0
    %746 = vmatprep.mubr.f32.mxu0 0.0
    %747 = vmatmul.mubr.f32.gmra.mxu0 %v681
    %v748 = vpop.f32.mrf.mxu0
    %v749 = vadd.f32 %v166, %v748
    %v750 = vpop.f32.mrf.mxu0
    %751 = vdwg.mxu0
    %v752 = vtanh.pop %v749
    %v753 = vld [vmem:[#allocation5 + $0x100] sm:$0xff]
    %v754 = vld [vmem:[#allocation5 + $0x108] sm:$0xff]
    %v755 = vld [vmem:[#allocation5 + $0x110] sm:$0xff]
    %v756 = vld [vmem:[#allocation5 + $0x118] sm:$0xff]
    %v757 = vld [vmem:[#allocation5 + $0x120] sm:$0xff]
    %v758 = vld [vmem:[#allocation5 + $0x128] sm:$0xff]
    %v759 = vld [vmem:[#allocation5 + $0x130] sm:$0xff]
    %v760 = vld [vmem:[#allocation5 + $0x138] sm:$0xff]
    %v761 = vld [vmem:[#allocation5 + $0x140] sm:$0xff]
    %v762 = vld [vmem:[#allocation5 + $0x148] sm:$0xff]
    %v763 = vld [vmem:[#allocation5 + $0x150] sm:$0xff]
    %v764 = vld [vmem:[#allocation5 + $0x158] sm:$0xff]
    %v765 = vld [vmem:[#allocation5 + $0x160] sm:$0xff]
    %v766 = vld [vmem:[#allocation5 + $0x168] sm:$0xff]
    %v767 = vld [vmem:[#allocation5 + $0x170] sm:$0xff]
    %v768 = vld [vmem:[#allocation5 + $0x178] sm:$0xff]
    %v769 = vld [vmem:[#allocation5 + $0x180] sm:$0x1]
    %v770 = vlaneseq
    %v771 = vshrl.u32 %v770, 7
    %v772 = vsub.s32 0, %v771
    %v773 = vrot.slane %v769, %v772
    %774 = vmatprep.subr.mxu0 0.0
    %775 = vmatpush1.msra.mxu0 %v768
    %776 = vmatprep.subr.mxu0 0.0
    %777 = vmatpush1.msra.mxu0 %v767
    %778 = vmatprep.subr.mxu0 0.0
    %779 = vmatpush1.msra.mxu0 %v766
    %780 = vmatprep.subr.mxu0 0.0
    %781 = vmatpush1.msra.mxu0 %v765
    %782 = vmatprep.subr.mxu0 0.0
    %783 = vmatpush1.msra.mxu0 %v764
    %784 = vmatprep.subr.mxu0 0.0
    %785 = vmatpush1.msra.mxu0 %v763
    %786 = vmatprep.subr.mxu0 0.0
    %787 = vmatpush1.msra.mxu0 %v762
    %788 = vmatprep.subr.mxu0 0.0
    %789 = vmatpush1.msra.mxu0 %v761
    %790 = vmatprep.subr.mxu0 0.0
    %791 = vmatpush1.msra.mxu0 %v760
    %792 = vmatprep.subr.mxu0 0.0
    %793 = vmatpush1.msra.mxu0 %v759
    %794 = vmatprep.subr.mxu0 0.0
    %795 = vmatpush1.msra.mxu0 %v758
    %796 = vmatprep.subr.mxu0 0.0
    %797 = vmatpush1.msra.mxu0 %v757
    %798 = vmatprep.subr.mxu0 0.0
    %799 = vmatpush1.msra.mxu0 %v756
    %800 = vmatprep.subr.mxu0 0.0
    %801 = vmatpush1.msra.mxu0 %v755
    %802 = vmatprep.subr.mxu0 0.0
    %803 = vmatpush1.msra.mxu0 %v754
    %804 = vmatprep.subr.mxu0 0.0
    %805 = vmatpush1.msra.mxu0 %v753
    %806 = vmatprep.subr.mxu0 0.0
    %807 = vmatpush2.msra.mxu0 0.0
    %808 = vmatprep.subr.mxu0 0.0
    %809 = vmatpush2.msra.mxu0 0.0
    %810 = vmatprep.subr.mxu0 0.0
    %811 = vmatpush2.msra.mxu0 0.0
    %812 = vmatprep.subr.mxu0 0.0
    %813 = vmatpush2.msra.mxu0 0.0
    %814 = vmatprep.subr.mxu0 0.0
    %815 = vmatpush2.msra.mxu0 0.0
    %816 = vmatprep.subr.mxu0 0.0
    %817 = vmatpush2.msra.mxu0 0.0
    %818 = vmatprep.subr.mxu0 0.0
    %819 = vmatpush2.msra.mxu0 0.0
    %820 = vmatprep.subr.mxu0 0.0
    %821 = vmatpush2.msra.mxu0 0.0
    %822 = vmatprep.subr.mxu0 0.0
    %823 = vmatpush2.msra.mxu0 0.0
    %824 = vmatprep.subr.mxu0 0.0
    %825 = vmatpush2.msra.mxu0 0.0
    %826 = vmatprep.subr.mxu0 0.0
    %827 = vmatpush2.msra.mxu0 0.0
    %828 = vmatprep.subr.mxu0 0.0
    %829 = vmatpush2.msra.mxu0 0.0
    %830 = vmatprep.subr.mxu0 0.0
    %831 = vmatpush2.msra.mxu0 0.0
    %832 = vmatprep.subr.mxu0 0.0
    %833 = vmatpush2.msra.mxu0 0.0
    %834 = vmatprep.subr.mxu0 0.0
    %835 = vmatpush2.msra.mxu0 0.0
    %836 = vmatprep.subr.mxu0 0.0
    %837 = vmatpush2.msra.mxu0 0.0
    %838 = vmatprep.mubr.f32.mxu0 0.0
    %839 = vmatmul.mubr.f32.gmra.mxu0 %v752
    %v840 = vpop.f32.mrf.mxu0
    %v841 = vadd.f32 %v773, %v840
    %v842 = vpop.f32.mrf.mxu0
    %843 = vdwg.mxu0
    %844 = vst [vmem:[#allocation7] sm:$0xff] %v841
    // Predicated region
    $region18: #{tpu_custom_call.1} parent=1 // pred_check
      _
    $region19: #{tpu_custom_call.1} parent=1 // pred_check_branch
      %846 = sbr.rel (0) target = $region21
    $region20: #{tpu_custom_call.1} parent=1 // pred_region
      %s848 = ssub.s32 128, 128
      %849 = vsyncadd [#allocation4], %s848
      %s851 = sshll.u32 [#allocation7], 4
      %s852 = int_to_ptr.vmem [resolvable:$true] %s851
      %854 = dma.vmem_to_hbm [thread:$0]  %s852, 128, %s2, [#allocation4]
    $region21: #{tpu_custom_call.1} parent=1 // pred_fallthru
      _
    // Predicated region
    $region22: #{tpu_custom_call.1} parent=1 // pred_check
      _
    $region23: #{tpu_custom_call.1} parent=1 // pred_check_branch
      %856 = sbr.rel (0) target = $region25
    $region24: #{tpu_custom_call.1} parent=1 // pred_region
      %857 = dma.done [#allocation4], 128
    $region25: #{tpu_custom_call.1} parent=1 // pred_fallthru
      _
    %858 = vsyncpa [#allocation3], 1
    %859 = vsyncpa [#allocation6], 1
    %860 = vsyncpa [#allocation4], 1

</llo_original>
